<compile_context>
chip_gen: v7x
topology: tpu7x:2x2x1
jax: 0.10.0
libtpu: 0.0.40
codegen_flags: <defaults>
</compile_context>

<pallas_src>
import functools
import math

import numpy as np
import jax
import jax.numpy as jnp
from jax.experimental import pallas as pl
from jax.experimental.pallas import tpu as pltpu

# ---- static problem configuration (the module hard-codes 5 normal target dists) ----
BATCH = 2
SEQ = 5
HIDDEN = 32
NUM_HEADS = 4
HEAD_DIM = HIDDEN // NUM_HEADS


def _make_normal_targets(seq_len: int) -> np.ndarray:
    """Row i = normalized N(i, 1) pdf at 0..seq_len-1 (matches scipy.stats.norm.pdf)."""
    pos = np.arange(seq_len, dtype=np.float64)
    rows = []
    for i in range(seq_len):
        pdf = np.exp(-0.5 * (pos - i) ** 2) / np.sqrt(2.0 * np.pi)
        rows.append(pdf / pdf.sum())
    return np.stack(rows).astype(np.float32)  # (S, S)


def _attn_kernel(x_ref, wqkv_ref, bqkv_ref, tgtbd_ref, mask_ref, ctx_ref, kl_ref,
                 *, hidden, num_heads, head_dim, scale, kl_const, inv_sb):
    """Single invocation: both batches, all heads, full KL reduction."""
    x = x_ref[...]                                            # (B*S, H)
    bs = x.shape[0]

    # One fused QKV matmul + one broadcast bias add.
    qkv = jnp.dot(x, wqkv_ref[...], preferred_element_type=jnp.float32) + bqkv_ref[...]
    q = qkv[:, 0:hidden] * scale                              # fold 1/sqrt(Dh) in once
    k = qkv[:, hidden:2 * hidden]
    v = qkv[:, 2 * hidden:3 * hidden]

    tgt_bd = tgtbd_ref[...]                                   # (B*S, B*S) block-diag targets
    neg_mask = mask_ref[...]                                  # 0 within batch, -1e30 across

    col_ids = jax.lax.broadcasted_iota(jnp.int32, (bs, hidden), 1)  # hoisted out of the loop
    ctx_acc = jnp.zeros((bs, hidden), jnp.float32)
    cross_rows = jnp.zeros((bs, 1), jnp.float32)              # per-row KL cross term

    for h in range(num_heads):                                # tiny static head loop
        lo = h * head_dim
        hi = lo + head_dim
        # Scores for both batches in one matmul (transpose fused into the dot);
        # cross-batch entries masked out additively.
        s = jnp.dot(q[:, lo:hi], k[:, lo:hi].T,
                    preferred_element_type=jnp.float32) + neg_mask       # (B*S, B*S)
        m = jnp.max(s, axis=-1, keepdims=True)
        e = jnp.exp(s - m)                                    # masked entries -> exactly 0
        denom = jnp.sum(e, axis=-1, keepdims=True)
        inv = pl.reciprocal(denom, approx=True)               # EUP slot
        inv = inv * (2.0 - denom * inv)                       # 1 Newton step -> full f32 accuracy
        logp = (s - m) - jnp.log(denom)                       # log-softmax (finite everywhere)
        # KL cross term: targets are 0 off-block, so masked logp contributes nothing.
        cross_rows = cross_rows + jnp.sum(tgt_bd * logp, axis=-1, keepdims=True)
        # Head h's V columns only; keeps the p@v result full-width so no
        # per-head 8-lane stores / concatenation are needed.
        v_h = jnp.where((col_ids >= lo) & (col_ids < hi), v, 0.0)
        ctx_acc = ctx_acc + jnp.dot(e, v_h, preferred_element_type=jnp.float32) * inv

    ctx_ref[...] = ctx_acc                                    # one lane-dense store
    # Finished KL reduction in-kernel; entropy term precomputed on host.
    kl_ref[...] = kl_const - inv_sb * jnp.sum(cross_rows, axis=0, keepdims=True)


def inner_modal_attention(x, wq, bq, wk, bk, wv, bv, targets_np):
    """Returns (context [B,S,H] float32, kl scalar float32) matching the PyTorch module."""
    B, S, H = x.shape
    nh, dh = NUM_HEADS, HEAD_DIM

    # Fuse the three projections host-side: one (H, 3H) weight, one (1, 3H) bias.
    w_qkv = jnp.concatenate([wq, wk, wv], axis=1)
    b_qkv = jnp.concatenate([bq, bk, bv], axis=1)

    # KLDivLoss(reduction='batchmean') on input [B, nh, S] divides by B only, then the
    # module means over query positions:
    #   kl = (nh/S) * sum_{i,s} t[i,s] log t[i,s]  -  (1/(S*B)) * sum_{b,h,i,s} t[i,s] logp[b,h,i,s]
    tgt64 = np.asarray(targets_np, dtype=np.float64)
    entropy_term = float(np.sum(tgt64 * np.log(tgt64)))   # targets are strictly positive
    kl_const = nh * entropy_term / S
    inv_sb = 1.0 / (S * B)

    # Block-diagonal targets and cross-batch additive mask (host constants).
    tgt_f32 = np.asarray(targets_np, dtype=np.float32)
    blk = np.kron(np.eye(B, dtype=np.float32), np.ones((S, S), np.float32))
    tgt_bd = jnp.asarray(np.kron(np.eye(B, dtype=np.float32), tgt_f32), dtype=jnp.float32)
    neg_mask = jnp.asarray((1.0 - blk) * np.float32(-1e30), dtype=jnp.float32)

    kernel = functools.partial(
        _attn_kernel, hidden=H, num_heads=nh, head_dim=dh,
        scale=1.0 / math.sqrt(dh), kl_const=kl_const, inv_sb=inv_sb)

    ctx2d, kl = pl.pallas_call(
        kernel,
        out_shape=(
            jax.ShapeDtypeStruct((B * S, H), jnp.float32),
            jax.ShapeDtypeStruct((1, 1), jnp.float32),
        ),
        in_specs=[pl.BlockSpec(memory_space=pltpu.MemorySpace.VMEM)] * 5,
        out_specs=(
            pl.BlockSpec(memory_space=pltpu.MemorySpace.VMEM),
            pl.BlockSpec(memory_space=pltpu.MemorySpace.VMEM),
        ),
    )(x.reshape(B * S, H), w_qkv, b_qkv, tgt_bd, neg_mask)

    return ctx2d.reshape(B, S, H), kl[0, 0]


def _reference(x, wq, bq, wk, bk, wv, bv, tgt):
    """Pure-JAX reference of the PyTorch forward, for validation."""
    B, S, H = x.shape
    q = x @ wq + bq[0]
    k = x @ wk + bk[0]
    v = x @ wv + bv[0]

    def split(t):  # [B,S,H] -> [B,nh,S,Dh]
        return t.reshape(B, S, NUM_HEADS, HEAD_DIM).transpose(0, 2, 1, 3)

    qh, kh, vh = split(q), split(k), split(v)
    scores = jnp.einsum('bhqd,bhkd->bhqk', qh, kh) / math.sqrt(HEAD_DIM)
    probs = jax.nn.softmax(scores, axis=-1)
    logp = jnp.log(probs)
    kl = jnp.einsum('is,bhis->i', tgt, jnp.log(tgt)[None, None] - logp) / B
    ctx = jnp.einsum('bhqk,bhkd->bhqd', probs, vh)
    ctx = ctx.transpose(0, 2, 1, 3).reshape(B, S, H)
    return ctx, kl.mean()


if __name__ == "__main__":
    key = jax.random.PRNGKey(0)
    ks = jax.random.split(key, 7)
    x = jax.random.normal(ks[0], (BATCH, SEQ, HIDDEN), dtype=jnp.float32)
    wq = 0.1 * jax.random.normal(ks[1], (HIDDEN, HIDDEN), dtype=jnp.float32)
    wk = 0.1 * jax.random.normal(ks[2], (HIDDEN, HIDDEN), dtype=jnp.float32)
    wv = 0.1 * jax.random.normal(ks[3], (HIDDEN, HIDDEN), dtype=jnp.float32)
    bq = 0.1 * jax.random.normal(ks[4], (1, HIDDEN), dtype=jnp.float32)
    bk = 0.1 * jax.random.normal(ks[5], (1, HIDDEN), dtype=jnp.float32)
    bv = 0.1 * jax.random.normal(ks[6], (1, HIDDEN), dtype=jnp.float32)
    tgt = _make_normal_targets(SEQ)

    ctx, kl = inner_modal_attention(x, wq, bq, wk, bk, wv, bv, tgt)
    ctx, kl = jax.block_until_ready((ctx, kl))

    ref_ctx, ref_kl = _reference(x, wq, bq, wk, bk, wv, bv, jnp.asarray(tgt))
    np.testing.assert_allclose(np.asarray(ctx), np.asarray(ref_ctx), rtol=1e-3, atol=1e-3)
    np.testing.assert_allclose(np.asarray(kl), np.asarray(ref_kl), rtol=1e-3, atol=1e-3)

    print("KERNEL_OK")
</pallas_src>

<mosaic_0001>
module attributes {stable_mosaic.version = 11 : i64} {
  func.func @_attn_kernel(%arg0: memref<10x32xf32, #tpu.memory_space<vmem>>, %arg1: memref<32x96xf32, #tpu.memory_space<vmem>>, %arg2: memref<1x96xf32, #tpu.memory_space<vmem>>, %arg3: memref<10x10xf32, #tpu.memory_space<vmem>>, %arg4: memref<10x10xf32, #tpu.memory_space<vmem>>, %arg5: memref<10x32xf32, #tpu.memory_space<vmem>>, %arg6: memref<1x1xf32, #tpu.memory_space<vmem>>) attributes {dimension_semantics = [], scalar_prefetch = 0 : i64, scratch_operands = 0 : i64, tpu.core_type = #tpu.core_type<tc>} {
    %c0 = arith.constant 0 : index
    %c0_0 = arith.constant 0 : index
    %0 = vector.load %arg0[%c0, %c0_0] : memref<10x32xf32, #tpu.memory_space<vmem>>, vector<10x32xf32>
    %c0_1 = arith.constant 0 : index
    %c0_2 = arith.constant 0 : index
    %1 = vector.load %arg1[%c0_1, %c0_2] : memref<32x96xf32, #tpu.memory_space<vmem>>, vector<32x96xf32>
    %cst = arith.constant dense<0.000000e+00> : vector<10x96xf32>
    %2 = tpu.matmul %0, %1, %cst {dimension_numbers = #tpu.dot_dimension_numbers<[1], [0], [0], [1], [0, 0, 1, 1], [], []>} : vector<10x32xf32>, vector<32x96xf32>, vector<10x96xf32> -> vector<10x96xf32>
    %c0_3 = arith.constant 0 : index
    %c0_4 = arith.constant 0 : index
    %3 = vector.load %arg2[%c0_3, %c0_4] : memref<1x96xf32, #tpu.memory_space<vmem>>, vector<1x96xf32>
    %4 = vector.broadcast %3 : vector<1x96xf32> to vector<10x96xf32>
    %5 = arith.addf %2, %4 : vector<10x96xf32>
    %6 = vector.extract_strided_slice %5 {offsets = [0, 0], sizes = [10, 32], strides = [1, 1]} : vector<10x96xf32> to vector<10x32xf32>
    %cst_5 = arith.constant 0.353553385 : f32
    %7 = vector.broadcast %cst_5 : f32 to vector<10x32xf32>
    %8 = arith.mulf %6, %7 : vector<10x32xf32>
    %9 = vector.extract_strided_slice %5 {offsets = [0, 32], sizes = [10, 32], strides = [1, 1]} : vector<10x96xf32> to vector<10x32xf32>
    %10 = vector.extract_strided_slice %5 {offsets = [0, 64], sizes = [10, 32], strides = [1, 1]} : vector<10x96xf32> to vector<10x32xf32>
    %c0_6 = arith.constant 0 : index
    %c0_7 = arith.constant 0 : index
    %11 = vector.load %arg3[%c0_6, %c0_7] : memref<10x10xf32, #tpu.memory_space<vmem>>, vector<10x10xf32>
    %c0_8 = arith.constant 0 : index
    %c0_9 = arith.constant 0 : index
    %12 = vector.load %arg4[%c0_8, %c0_9] : memref<10x10xf32, #tpu.memory_space<vmem>>, vector<10x10xf32>
    %13 = tpu.iota {dimensions = array<i32: 1>} : vector<10x32xi32>
    %cst_10 = arith.constant 0.000000e+00 : f32
    %14 = vector.broadcast %cst_10 : f32 to vector<10x32xf32>
    %cst_11 = arith.constant 0.000000e+00 : f32
    %15 = vector.broadcast %cst_11 : f32 to vector<10x1xf32>
    %16 = vector.extract_strided_slice %8 {offsets = [0, 0], sizes = [10, 8], strides = [1, 1]} : vector<10x32xf32> to vector<10x8xf32>
    %17 = vector.extract_strided_slice %9 {offsets = [0, 0], sizes = [10, 8], strides = [1, 1]} : vector<10x32xf32> to vector<10x8xf32>
    %18 = tpu.transpose %17, [1, 0] : vector<10x8xf32> -> vector<8x10xf32>
    %cst_12 = arith.constant dense<0.000000e+00> : vector<10x10xf32>
    %19 = tpu.matmul %16, %18, %cst_12 {dimension_numbers = #tpu.dot_dimension_numbers<[1], [0], [0], [1], [0, 0, 1, 1], [], []>} : vector<10x8xf32>, vector<8x10xf32>, vector<10x10xf32> -> vector<10x10xf32>
    %20 = arith.addf %19, %12 : vector<10x10xf32>
    %cst_13 = arith.constant dense<0xFF800000> : vector<10xf32>
    %21 = vector.multi_reduction <maximumf>, %20, %cst_13 [1] : vector<10x10xf32> to vector<10xf32>
    %22 = vector.shape_cast %21 : vector<10xf32> to vector<10x1xf32>
    %23 = vector.broadcast %22 : vector<10x1xf32> to vector<10x10xf32>
    %24 = arith.subf %20, %23 : vector<10x10xf32>
    %25 = math.exp %24 : vector<10x10xf32>
    %cst_14 = arith.constant dense<0.000000e+00> : vector<10xf32>
    %26 = vector.multi_reduction <add>, %25, %cst_14 [1] : vector<10x10xf32> to vector<10xf32>
    %27 = vector.shape_cast %26 : vector<10xf32> to vector<10x1xf32>
    %28 = tpu.reciprocal %27 {approx = true} : vector<10x1xf32> -> vector<10x1xf32>
    %29 = arith.mulf %27, %28 : vector<10x1xf32>
    %cst_15 = arith.constant 2.000000e+00 : f32
    %30 = vector.broadcast %cst_15 : f32 to vector<10x1xf32>
    %31 = arith.subf %30, %29 : vector<10x1xf32>
    %32 = arith.mulf %28, %31 : vector<10x1xf32>
    %33 = vector.broadcast %22 : vector<10x1xf32> to vector<10x10xf32>
    %34 = arith.subf %20, %33 : vector<10x10xf32>
    %35 = math.log %27 : vector<10x1xf32>
    %36 = vector.broadcast %35 : vector<10x1xf32> to vector<10x10xf32>
    %37 = arith.subf %34, %36 : vector<10x10xf32>
    %38 = arith.mulf %11, %37 : vector<10x10xf32>
    %cst_16 = arith.constant dense<0.000000e+00> : vector<10xf32>
    %39 = vector.multi_reduction <add>, %38, %cst_16 [1] : vector<10x10xf32> to vector<10xf32>
    %40 = vector.shape_cast %39 : vector<10xf32> to vector<10x1xf32>
    %41 = arith.addf %15, %40 : vector<10x1xf32>
    %c0_i32 = arith.constant 0 : i32
    %42 = vector.broadcast %c0_i32 : i32 to vector<10x32xi32>
    %43 = arith.cmpi sge, %13, %42 : vector<10x32xi32>
    %c8_i32 = arith.constant 8 : i32
    %44 = vector.broadcast %c8_i32 : i32 to vector<10x32xi32>
    %45 = arith.cmpi slt, %13, %44 : vector<10x32xi32>
    %46 = arith.andi %43, %45 : vector<10x32xi1>
    %cst_17 = arith.constant 0.000000e+00 : f32
    %47 = vector.broadcast %cst_17 : f32 to vector<10x32xf32>
    %48 = arith.select %46, %10, %47 : vector<10x32xi1>, vector<10x32xf32>
    %cst_18 = arith.constant dense<0.000000e+00> : vector<10x32xf32>
    %49 = tpu.matmul %25, %48, %cst_18 {dimension_numbers = #tpu.dot_dimension_numbers<[1], [0], [0], [1], [0, 0, 1, 1], [], []>} : vector<10x10xf32>, vector<10x32xf32>, vector<10x32xf32> -> vector<10x32xf32>
    %50 = vector.broadcast %32 : vector<10x1xf32> to vector<10x32xf32>
    %51 = arith.mulf %49, %50 : vector<10x32xf32>
    %52 = arith.addf %14, %51 : vector<10x32xf32>
    %53 = vector.extract_strided_slice %8 {offsets = [0, 8], sizes = [10, 8], strides = [1, 1]} : vector<10x32xf32> to vector<10x8xf32>
    %54 = vector.extract_strided_slice %9 {offsets = [0, 8], sizes = [10, 8], strides = [1, 1]} : vector<10x32xf32> to vector<10x8xf32>
    %55 = tpu.transpose %54, [1, 0] : vector<10x8xf32> -> vector<8x10xf32>
    %cst_19 = arith.constant dense<0.000000e+00> : vector<10x10xf32>
    %56 = tpu.matmul %53, %55, %cst_19 {dimension_numbers = #tpu.dot_dimension_numbers<[1], [0], [0], [1], [0, 0, 1, 1], [], []>} : vector<10x8xf32>, vector<8x10xf32>, vector<10x10xf32> -> vector<10x10xf32>
    %57 = arith.addf %56, %12 : vector<10x10xf32>
    %cst_20 = arith.constant dense<0xFF800000> : vector<10xf32>
    %58 = vector.multi_reduction <maximumf>, %57, %cst_20 [1] : vector<10x10xf32> to vector<10xf32>
    %59 = vector.shape_cast %58 : vector<10xf32> to vector<10x1xf32>
    %60 = vector.broadcast %59 : vector<10x1xf32> to vector<10x10xf32>
    %61 = arith.subf %57, %60 : vector<10x10xf32>
    %62 = math.exp %61 : vector<10x10xf32>
    %cst_21 = arith.constant dense<0.000000e+00> : vector<10xf32>
    %63 = vector.multi_reduction <add>, %62, %cst_21 [1] : vector<10x10xf32> to vector<10xf32>
    %64 = vector.shape_cast %63 : vector<10xf32> to vector<10x1xf32>
    %65 = tpu.reciprocal %64 {approx = true} : vector<10x1xf32> -> vector<10x1xf32>
    %66 = arith.mulf %64, %65 : vector<10x1xf32>
    %cst_22 = arith.constant 2.000000e+00 : f32
    %67 = vector.broadcast %cst_22 : f32 to vector<10x1xf32>
    %68 = arith.subf %67, %66 : vector<10x1xf32>
    %69 = arith.mulf %65, %68 : vector<10x1xf32>
    %70 = vector.broadcast %59 : vector<10x1xf32> to vector<10x10xf32>
    %71 = arith.subf %57, %70 : vector<10x10xf32>
    %72 = math.log %64 : vector<10x1xf32>
    %73 = vector.broadcast %72 : vector<10x1xf32> to vector<10x10xf32>
    %74 = arith.subf %71, %73 : vector<10x10xf32>
    %75 = arith.mulf %11, %74 : vector<10x10xf32>
    %cst_23 = arith.constant dense<0.000000e+00> : vector<10xf32>
    %76 = vector.multi_reduction <add>, %75, %cst_23 [1] : vector<10x10xf32> to vector<10xf32>
    %77 = vector.shape_cast %76 : vector<10xf32> to vector<10x1xf32>
    %78 = arith.addf %41, %77 : vector<10x1xf32>
    %c8_i32_24 = arith.constant 8 : i32
    %79 = vector.broadcast %c8_i32_24 : i32 to vector<10x32xi32>
    %80 = arith.cmpi sge, %13, %79 : vector<10x32xi32>
    %c16_i32 = arith.constant 16 : i32
    %81 = vector.broadcast %c16_i32 : i32 to vector<10x32xi32>
    %82 = arith.cmpi slt, %13, %81 : vector<10x32xi32>
    %83 = arith.andi %80, %82 : vector<10x32xi1>
    %cst_25 = arith.constant 0.000000e+00 : f32
    %84 = vector.broadcast %cst_25 : f32 to vector<10x32xf32>
    %85 = arith.select %83, %10, %84 : vector<10x32xi1>, vector<10x32xf32>
    %cst_26 = arith.constant dense<0.000000e+00> : vector<10x32xf32>
    %86 = tpu.matmul %62, %85, %cst_26 {dimension_numbers = #tpu.dot_dimension_numbers<[1], [0], [0], [1], [0, 0, 1, 1], [], []>} : vector<10x10xf32>, vector<10x32xf32>, vector<10x32xf32> -> vector<10x32xf32>
    %87 = vector.broadcast %69 : vector<10x1xf32> to vector<10x32xf32>
    %88 = arith.mulf %86, %87 : vector<10x32xf32>
    %89 = arith.addf %52, %88 : vector<10x32xf32>
    %90 = vector.extract_strided_slice %8 {offsets = [0, 16], sizes = [10, 8], strides = [1, 1]} : vector<10x32xf32> to vector<10x8xf32>
    %91 = vector.extract_strided_slice %9 {offsets = [0, 16], sizes = [10, 8], strides = [1, 1]} : vector<10x32xf32> to vector<10x8xf32>
    %92 = tpu.transpose %91, [1, 0] : vector<10x8xf32> -> vector<8x10xf32>
    %cst_27 = arith.constant dense<0.000000e+00> : vector<10x10xf32>
    %93 = tpu.matmul %90, %92, %cst_27 {dimension_numbers = #tpu.dot_dimension_numbers<[1], [0], [0], [1], [0, 0, 1, 1], [], []>} : vector<10x8xf32>, vector<8x10xf32>, vector<10x10xf32> -> vector<10x10xf32>
    %94 = arith.addf %93, %12 : vector<10x10xf32>
    %cst_28 = arith.constant dense<0xFF800000> : vector<10xf32>
    %95 = vector.multi_reduction <maximumf>, %94, %cst_28 [1] : vector<10x10xf32> to vector<10xf32>
    %96 = vector.shape_cast %95 : vector<10xf32> to vector<10x1xf32>
    %97 = vector.broadcast %96 : vector<10x1xf32> to vector<10x10xf32>
    %98 = arith.subf %94, %97 : vector<10x10xf32>
    %99 = math.exp %98 : vector<10x10xf32>
    %cst_29 = arith.constant dense<0.000000e+00> : vector<10xf32>
    %100 = vector.multi_reduction <add>, %99, %cst_29 [1] : vector<10x10xf32> to vector<10xf32>
    %101 = vector.shape_cast %100 : vector<10xf32> to vector<10x1xf32>
    %102 = tpu.reciprocal %101 {approx = true} : vector<10x1xf32> -> vector<10x1xf32>
    %103 = arith.mulf %101, %102 : vector<10x1xf32>
    %cst_30 = arith.constant 2.000000e+00 : f32
    %104 = vector.broadcast %cst_30 : f32 to vector<10x1xf32>
    %105 = arith.subf %104, %103 : vector<10x1xf32>
    %106 = arith.mulf %102, %105 : vector<10x1xf32>
    %107 = vector.broadcast %96 : vector<10x1xf32> to vector<10x10xf32>
    %108 = arith.subf %94, %107 : vector<10x10xf32>
    %109 = math.log %101 : vector<10x1xf32>
    %110 = vector.broadcast %109 : vector<10x1xf32> to vector<10x10xf32>
    %111 = arith.subf %108, %110 : vector<10x10xf32>
    %112 = arith.mulf %11, %111 : vector<10x10xf32>
    %cst_31 = arith.constant dense<0.000000e+00> : vector<10xf32>
    %113 = vector.multi_reduction <add>, %112, %cst_31 [1] : vector<10x10xf32> to vector<10xf32>
    %114 = vector.shape_cast %113 : vector<10xf32> to vector<10x1xf32>
    %115 = arith.addf %78, %114 : vector<10x1xf32>
    %c16_i32_32 = arith.constant 16 : i32
    %116 = vector.broadcast %c16_i32_32 : i32 to vector<10x32xi32>
    %117 = arith.cmpi sge, %13, %116 : vector<10x32xi32>
    %c24_i32 = arith.constant 24 : i32
    %118 = vector.broadcast %c24_i32 : i32 to vector<10x32xi32>
    %119 = arith.cmpi slt, %13, %118 : vector<10x32xi32>
    %120 = arith.andi %117, %119 : vector<10x32xi1>
    %cst_33 = arith.constant 0.000000e+00 : f32
    %121 = vector.broadcast %cst_33 : f32 to vector<10x32xf32>
    %122 = arith.select %120, %10, %121 : vector<10x32xi1>, vector<10x32xf32>
    %cst_34 = arith.constant dense<0.000000e+00> : vector<10x32xf32>
    %123 = tpu.matmul %99, %122, %cst_34 {dimension_numbers = #tpu.dot_dimension_numbers<[1], [0], [0], [1], [0, 0, 1, 1], [], []>} : vector<10x10xf32>, vector<10x32xf32>, vector<10x32xf32> -> vector<10x32xf32>
    %124 = vector.broadcast %106 : vector<10x1xf32> to vector<10x32xf32>
    %125 = arith.mulf %123, %124 : vector<10x32xf32>
    %126 = arith.addf %89, %125 : vector<10x32xf32>
    %127 = vector.extract_strided_slice %8 {offsets = [0, 24], sizes = [10, 8], strides = [1, 1]} : vector<10x32xf32> to vector<10x8xf32>
    %128 = vector.extract_strided_slice %9 {offsets = [0, 24], sizes = [10, 8], strides = [1, 1]} : vector<10x32xf32> to vector<10x8xf32>
    %129 = tpu.transpose %128, [1, 0] : vector<10x8xf32> -> vector<8x10xf32>
    %cst_35 = arith.constant dense<0.000000e+00> : vector<10x10xf32>
    %130 = tpu.matmul %127, %129, %cst_35 {dimension_numbers = #tpu.dot_dimension_numbers<[1], [0], [0], [1], [0, 0, 1, 1], [], []>} : vector<10x8xf32>, vector<8x10xf32>, vector<10x10xf32> -> vector<10x10xf32>
    %131 = arith.addf %130, %12 : vector<10x10xf32>
    %cst_36 = arith.constant dense<0xFF800000> : vector<10xf32>
    %132 = vector.multi_reduction <maximumf>, %131, %cst_36 [1] : vector<10x10xf32> to vector<10xf32>
    %133 = vector.shape_cast %132 : vector<10xf32> to vector<10x1xf32>
    %134 = vector.broadcast %133 : vector<10x1xf32> to vector<10x10xf32>
    %135 = arith.subf %131, %134 : vector<10x10xf32>
    %136 = math.exp %135 : vector<10x10xf32>
    %cst_37 = arith.constant dense<0.000000e+00> : vector<10xf32>
    %137 = vector.multi_reduction <add>, %136, %cst_37 [1] : vector<10x10xf32> to vector<10xf32>
    %138 = vector.shape_cast %137 : vector<10xf32> to vector<10x1xf32>
    %139 = tpu.reciprocal %138 {approx = true} : vector<10x1xf32> -> vector<10x1xf32>
    %140 = arith.mulf %138, %139 : vector<10x1xf32>
    %cst_38 = arith.constant 2.000000e+00 : f32
    %141 = vector.broadcast %cst_38 : f32 to vector<10x1xf32>
    %142 = arith.subf %141, %140 : vector<10x1xf32>
    %143 = arith.mulf %139, %142 : vector<10x1xf32>
    %144 = vector.broadcast %133 : vector<10x1xf32> to vector<10x10xf32>
    %145 = arith.subf %131, %144 : vector<10x10xf32>
    %146 = math.log %138 : vector<10x1xf32>
    %147 = vector.broadcast %146 : vector<10x1xf32> to vector<10x10xf32>
    %148 = arith.subf %145, %147 : vector<10x10xf32>
    %149 = arith.mulf %11, %148 : vector<10x10xf32>
    %cst_39 = arith.constant dense<0.000000e+00> : vector<10xf32>
    %150 = vector.multi_reduction <add>, %149, %cst_39 [1] : vector<10x10xf32> to vector<10xf32>
    %151 = vector.shape_cast %150 : vector<10xf32> to vector<10x1xf32>
    %152 = arith.addf %115, %151 : vector<10x1xf32>
    %c24_i32_40 = arith.constant 24 : i32
    %153 = vector.broadcast %c24_i32_40 : i32 to vector<10x32xi32>
    %154 = arith.cmpi sge, %13, %153 : vector<10x32xi32>
    %c32_i32 = arith.constant 32 : i32
    %155 = vector.broadcast %c32_i32 : i32 to vector<10x32xi32>
    %156 = arith.cmpi slt, %13, %155 : vector<10x32xi32>
    %157 = arith.andi %154, %156 : vector<10x32xi1>
    %cst_41 = arith.constant 0.000000e+00 : f32
    %158 = vector.broadcast %cst_41 : f32 to vector<10x32xf32>
    %159 = arith.select %157, %10, %158 : vector<10x32xi1>, vector<10x32xf32>
    %cst_42 = arith.constant dense<0.000000e+00> : vector<10x32xf32>
    %160 = tpu.matmul %136, %159, %cst_42 {dimension_numbers = #tpu.dot_dimension_numbers<[1], [0], [0], [1], [0, 0, 1, 1], [], []>} : vector<10x10xf32>, vector<10x32xf32>, vector<10x32xf32> -> vector<10x32xf32>
    %161 = vector.broadcast %143 : vector<10x1xf32> to vector<10x32xf32>
    %162 = arith.mulf %160, %161 : vector<10x32xf32>
    %163 = arith.addf %126, %162 : vector<10x32xf32>
    %c0_43 = arith.constant 0 : index
    %c0_44 = arith.constant 0 : index
    %164 = vector.load %arg5[%c0_43, %c0_44] : memref<10x32xf32, #tpu.memory_space<vmem>>, vector<10x32xf32>
    tpu.vector_store %arg5[%c0_43, %c0_44], %163 {strides = array<i32>} : memref<10x32xf32, #tpu.memory_space<vmem>>, vector<10x32xf32>,
    %cst_45 = arith.constant dense<0.000000e+00> : vector<1xf32>
    %165 = vector.multi_reduction <add>, %152, %cst_45 [0] : vector<10x1xf32> to vector<1xf32>
    %166 = vector.shape_cast %165 : vector<1xf32> to vector<1x1xf32>
    %cst_46 = arith.constant 1.000000e-01 : f32
    %167 = vector.broadcast %cst_46 : f32 to vector<1x1xf32>
    %168 = arith.mulf %167, %166 : vector<1x1xf32>
    %cst_47 = arith.constant -4.57002211 : f32
    %169 = vector.broadcast %cst_47 : f32 to vector<1x1xf32>
    %170 = arith.subf %169, %168 : vector<1x1xf32>
    %c0_48 = arith.constant 0 : index
    %c0_49 = arith.constant 0 : index
    %171 = vector.load %arg6[%c0_48, %c0_49] : memref<1x1xf32, #tpu.memory_space<vmem>>, vector<1x1xf32>
    tpu.vector_store %arg6[%c0_48, %c0_49], %170 {strides = array<i32>} : memref<1x1xf32, #tpu.memory_space<vmem>>, vector<1x1xf32>,
    return
  }
}

</mosaic_0001>

<llo_original>
// kernel: tpu_custom_call.1
$region0: #{tpu_custom_call.1}
  #allocation0 [shape = 'u32[]', space=smem, size = 0x4, offset = 0x4, fixed_abs, tag = 'smem constant byte address 0x4 - core index']
  #allocation1 [shape = 'u32[144,128]{1,0:T(1,128)}', space=vmem, size = 0x12000, scoped, tag = 'internal scratch']
  %s0 = inlined_call_operand.hbm [shape: f32[10,32], index: 0, kind: input, shape index: {}]
  %s1 = inlined_call_operand.hbm [shape: f32[32,96], index: 1, kind: input, shape index: {}]
  %s2 = inlined_call_operand.vmem [shape: f32[1,96], index: 2, kind: input, shape index: {}]
  %s3 = inlined_call_operand.hbm [shape: f32[10,10], index: 3, kind: input, shape index: {}]
  %s4 = inlined_call_operand.hbm [shape: f32[10,10], index: 4, kind: input, shape index: {}]
  %s5 = inlined_call_operand.hbm [shape: f32[10,32], index: 5, kind: output, shape index: {0}]
  %s6 = inlined_call_operand.hbm [shape: f32[1,1], index: 6, kind: output, shape index: {1}]
  %7 = xla_tuple %s5, %s6
  %s8 = sld [smem:[#allocation0]]
  $region54: #{tpu_custom_call.1} parent=0
    _
  %s10 = ssub.s32 1, %s8
  %s11 = scalar_select 0, %s10, %s8
  $region1: #{tpu_custom_call.1} parent=0
    #allocation2 [shape = 'u8[8192]{0}', space=vmem, size = 0x2000, scoped, tag = 'input window, operand 0, single buffered']
    #allocation3 [shape = 's32[1]{0}', space=sflag, size = 0x4, scoped, tag = 'scoped memory for tpu_custom_call.1']
    #allocation4 [shape = 's32[1]{0}', space=sflag, size = 0x4, scoped, tag = 'scoped memory for tpu_custom_call.1']
    #allocation5 [shape = 'u8[16384]{0}', space=vmem, size = 0x4000, scoped, tag = 'input window, operand 1, single buffered']
    #allocation6 [shape = 's32[1]{0}', space=sflag, size = 0x4, scoped, tag = 'scoped memory for tpu_custom_call.1']
    #allocation7 [shape = 'u8[8192]{0}', space=vmem, size = 0x2000, scoped, tag = 'input window, operand 3, single buffered']
    #allocation8 [shape = 'u8[8192]{0}', space=vmem, size = 0x2000, scoped, tag = 'input window, operand 4, single buffered']
    #allocation9 [shape = 's32[1]{0}', space=sflag, size = 0x4, scoped, tag = 'scoped memory for tpu_custom_call.1']
    #allocation10 [shape = 'u8[8192]{0}', space=vmem, size = 0x2000, scoped, tag = 'output window, operand 0, single buffered']
    #allocation11 [shape = 'u8[512]{0}', space=vmem, size = 0x400, scoped, tag = 'output window, operand 1, single buffered']
    #allocation12 [shape = 's32[1]{0}', space=sflag, size = 0x4, scoped, tag = 'scoped memory for tpu_custom_call.1']
    %12 = vsyncpa [#allocation3], 0
    %13 = vsyncpa [#allocation6], 0
    %14 = vsyncpa [#allocation9], 0
    %15 = vsyncpa [#allocation4], 0
    %16 = vsyncpa [#allocation12], 0
    // Predicated region
    $region2: #{tpu_custom_call.1} parent=1 // pred_check
      _
    $region3: #{tpu_custom_call.1} parent=1 // pred_check_branch
      %18 = sbr.rel (0) target = $region5
    $region4: #{tpu_custom_call.1} parent=1 // pred_region
      %s20 = ssub.s32 256, 256
      %21 = vsyncadd [#allocation3], %s20
      %s22 = sshll.u32 [#allocation2], 4
      %s23 = int_to_ptr.vmem [resolvable:$true] %s22
      %28 = dma.hbm_to_vmem [thread:$0]  %s0, 256, %s23, [#allocation3], 128, 128, 8
    $region5: #{tpu_custom_call.1} parent=1 // pred_fallthru
      _
    // Predicated region
    $region6: #{tpu_custom_call.1} parent=1 // pred_check
      _
    $region7: #{tpu_custom_call.1} parent=1 // pred_check_branch
      %30 = sbr.rel (0) target = $region9
    $region8: #{tpu_custom_call.1} parent=1 // pred_region
      %s32 = ssub.s32 512, 512
      %33 = vsyncadd [#allocation6], %s32
      %s34 = sshll.u32 [#allocation5], 4
      %s35 = int_to_ptr.vmem [resolvable:$true] %s34
      %40 = dma.hbm_to_vmem [thread:$0]  %s1, 512, %s35, [#allocation6], 128, 128, 8
    $region9: #{tpu_custom_call.1} parent=1 // pred_fallthru
      _
    // Predicated region
    $region10: #{tpu_custom_call.1} parent=1 // pred_check
      _
    $region11: #{tpu_custom_call.1} parent=1 // pred_check_branch
      %42 = sbr.rel (0) target = $region13
    $region12: #{tpu_custom_call.1} parent=1 // pred_region
      _
    $region13: #{tpu_custom_call.1} parent=1 // pred_fallthru
      _
    // Predicated region
    $region14: #{tpu_custom_call.1} parent=1 // pred_check
      _
    $region15: #{tpu_custom_call.1} parent=1 // pred_check_branch
      %44 = sbr.rel (0) target = $region17
    $region16: #{tpu_custom_call.1} parent=1 // pred_region
      %s46 = ssub.s32 256, 256
      %47 = vsyncadd [#allocation6], %s46
      %s48 = sshll.u32 [#allocation7], 4
      %s49 = int_to_ptr.vmem [resolvable:$true] %s48
      %54 = dma.hbm_to_vmem [thread:$0]  %s3, 256, %s49, [#allocation6], 128, 128, 8
    $region17: #{tpu_custom_call.1} parent=1 // pred_fallthru
      _
    // Predicated region
    $region18: #{tpu_custom_call.1} parent=1 // pred_check
      _
    $region19: #{tpu_custom_call.1} parent=1 // pred_check_branch
      %56 = sbr.rel (0) target = $region21
    $region20: #{tpu_custom_call.1} parent=1 // pred_region
      %s58 = ssub.s32 256, 256
      %59 = vsyncadd [#allocation9], %s58
      %s60 = sshll.u32 [#allocation8], 4
      %s61 = int_to_ptr.vmem [resolvable:$true] %s60
      %66 = dma.hbm_to_vmem [thread:$0]  %s4, 256, %s61, [#allocation9], 128, 128, 8
    $region21: #{tpu_custom_call.1} parent=1 // pred_fallthru
      _
    // Predicated region
    $region22: #{tpu_custom_call.1} parent=1 // pred_check
      _
    $region23: #{tpu_custom_call.1} parent=1 // pred_check_branch
      %68 = sbr.rel (0) target = $region25
    $region24: #{tpu_custom_call.1} parent=1 // pred_region
      %69 = dma.done [#allocation3], 256
    $region25: #{tpu_custom_call.1} parent=1 // pred_fallthru
      _
    // Predicated region
    $region26: #{tpu_custom_call.1} parent=1 // pred_check
      _
    $region27: #{tpu_custom_call.1} parent=1 // pred_check_branch
      %71 = sbr.rel (0) target = $region29
    $region28: #{tpu_custom_call.1} parent=1 // pred_region
      %72 = dma.done [#allocation6], 512
    $region29: #{tpu_custom_call.1} parent=1 // pred_fallthru
      _
    // Predicated region
    $region30: #{tpu_custom_call.1} parent=1 // pred_check
      _
    $region31: #{tpu_custom_call.1} parent=1 // pred_check_branch
      %74 = sbr.rel (0) target = $region33
    $region32: #{tpu_custom_call.1} parent=1 // pred_region
      %75 = dma.done [#allocation6], 256
    $region33: #{tpu_custom_call.1} parent=1 // pred_fallthru
      _
    // Predicated region
    $region34: #{tpu_custom_call.1} parent=1 // pred_check
      _
    $region35: #{tpu_custom_call.1} parent=1 // pred_check_branch
      %77 = sbr.rel (0) target = $region37
    $region36: #{tpu_custom_call.1} parent=1 // pred_region
      %78 = dma.done [#allocation9], 256
    $region37: #{tpu_custom_call.1} parent=1 // pred_fallthru
      _
    %v79 = vld [vmem:[#allocation2] sm:$0xff]
    %v80 = vld [vmem:[#allocation2 + $0x8] sm:$0x3]
    %v81 = vld [vmem:[#allocation5] sm:$0xff]
    %v82 = vld [vmem:[#allocation5 + $0x8] sm:$0xff]
    %v83 = vld [vmem:[#allocation5 + $0x10] sm:$0xff]
    %v84 = vld [vmem:[#allocation5 + $0x18] sm:$0xff]
    %v85 = vld [vmem:[%s2] sm:$0x1]
    %v87 = vlaneseq
    %v88 = vshrl.u32 %v87, 7
    %v89 = vsub.s32 0, %v88
    %v90 = vrot.slane %v85, %v89
    %vm92 = vcmask 261120
    %v94 = vsel %vm92, %v79, 0
    %v97 = vsel %vm92, %v80, 0
    %99 = vmatprep.subr.mxu0 0.0
    %100 = vmatpush1.msra.mxu0 %v81
    %101 = vmatprep.subr.mxu0 0.0
    %102 = vmatpush1.msra.mxu0 %v82
    %103 = vmatprep.subr.mxu0 0.0
    %104 = vmatpush1.msra.mxu0 %v83
    %105 = vmatprep.subr.mxu0 0.0
    %106 = vmatpush1.msra.mxu0 %v84
    %107 = vmatprep.subr.mxu0 0.0
    %108 = vmatpush1.msra.mxu0 0.0
    %109 = vmatprep.subr.mxu0 0.0
    %110 = vmatpush1.msra.mxu0 0.0
    %111 = vmatprep.subr.mxu0 0.0
    %112 = vmatpush1.msra.mxu0 0.0
    %113 = vmatprep.subr.mxu0 0.0
    %114 = vmatpush1.msra.mxu0 0.0
    %115 = vmatprep.subr.mxu0 0.0
    %116 = vmatpush1.msra.mxu0 0.0
    %117 = vmatprep.subr.mxu0 0.0
    %118 = vmatpush1.msra.mxu0 0.0
    %119 = vmatprep.subr.mxu0 0.0
    %120 = vmatpush1.msra.mxu0 0.0
    %121 = vmatprep.subr.mxu0 0.0
    %122 = vmatpush1.msra.mxu0 0.0
    %123 = vmatprep.subr.mxu0 0.0
    %124 = vmatpush1.msra.mxu0 0.0
    %125 = vmatprep.subr.mxu0 0.0
    %126 = vmatpush1.msra.mxu0 0.0
    %127 = vmatprep.subr.mxu0 0.0
    %128 = vmatpush1.msra.mxu0 0.0
    %129 = vmatprep.subr.mxu0 0.0
    %130 = vmatpush1.msra.mxu0 0.0
    %131 = vmatprep.subr.mxu0 0.0
    %132 = vmatpush1.msra.mxu0 0.0
    %133 = vmatprep.subr.mxu0 0.0
    %134 = vmatpush1.msra.mxu0 0.0
    %135 = vmatprep.subr.mxu0 0.0
    %136 = vmatpush1.msra.mxu0 0.0
    %137 = vmatprep.subr.mxu0 0.0
    %138 = vmatpush1.msra.mxu0 0.0
    %139 = vmatprep.subr.mxu0 0.0
    %140 = vmatpush1.msra.mxu0 0.0
    %141 = vmatprep.subr.mxu0 0.0
    %142 = vmatpush1.msra.mxu0 0.0
    %143 = vmatprep.subr.mxu0 0.0
    %144 = vmatpush1.msra.mxu0 0.0
    %145 = vmatprep.subr.mxu0 0.0
    %146 = vmatpush1.msra.mxu0 0.0
    %147 = vmatprep.subr.mxu0 0.0
    %148 = vmatpush1.msra.mxu0 0.0
    %149 = vmatprep.subr.mxu0 0.0
    %150 = vmatpush1.msra.mxu0 0.0
    %151 = vmatprep.subr.mxu0 0.0
    %152 = vmatpush1.msra.mxu0 0.0
    %153 = vmatprep.subr.mxu0 0.0
    %154 = vmatpush1.msra.mxu0 0.0
    %155 = vmatprep.subr.mxu0 0.0
    %156 = vmatpush1.msra.mxu0 0.0
    %157 = vmatprep.subr.mxu0 0.0
    %158 = vmatpush1.msra.mxu0 0.0
    %159 = vmatprep.subr.mxu0 0.0
    %160 = vmatpush1.msra.mxu0 0.0
    %161 = vmatprep.subr.mxu0 0.0
    %162 = vmatpush1.msra.mxu0 0.0
    %163 = vmatprep.mubr.f32.mxu0 0.0
    %164 = vmatmul.mubr.f32.gmra.mrb[0].mxu0 %v94
    %v165 = vpop.f32.mrb[0].mxu0
    %v166 = vadd.f32 %v90, %v165
    %v167 = vpop.f32.mrb[0].mxu0
    %168 = vmatprep.mubr.f32.mxu0 0.0
    %169 = vmatmul.mubr.f32.gmra.mrb[0].mxu0 %v97
    %v170 = vpop.f32.mrb[0].mxu0
    %v171 = vadd.f32 %v90, %v170
    %v172 = vpop.f32.mrb[0].mxu0
    %173 = vdwg.mxu0
    %v174 = vmul.f32 %v166, 0.35355338
    %v175 = vmul.f32 %v171, 0.35355338
    %v176 = vld [vmem:[#allocation7] sm:$0xff]
    %v177 = vld [vmem:[#allocation7 + $0x8] sm:$0x3]
    %v178 = vld [vmem:[#allocation8] sm:$0xff]
    %v179 = vld [vmem:[#allocation8 + $0x8] sm:$0x3]
    %v180 = vlaneseq
    %v181 = vand.u32 %v180, 127
    %184 = vrot.lane.b32.xlu0 %v166, 96
    %v185 = vpop.permute.xlu0 %184
    %186 = vrot.lane.b32.xlu0 %v171, 96
    %v187 = vpop.permute.xlu0 %186
    %vm188 = vcmask 64512
    %v190 = vsel %vm188, %v174, 0
    %v193 = vsel %vm188, %v175, 0
    %v195 = vsel %vm188, %v185, 0
    %v197 = vsel %vm188, %v187, 0
    %199 = vmatprep.subr.mxu0 0.0
    %200 = vmatpush1.xpose.msra.mxu0 %v195
    %201 = vmatprep.subr.mxu0 0.0
    %202 = vmatpush1.xpose.msra.mxu0 %v197
    %203 = vmatprep.subr.mxu0 0.0
    %204 = vmatpush1.xpose.msra.mxu0 0.0
    %205 = vmatprep.subr.mxu0 0.0
    %206 = vmatpush1.xpose.msra.mxu0 0.0
    %207 = vmatprep.subr.mxu0 0.0
    %208 = vmatpush1.xpose.msra.mxu0 0.0
    %209 = vmatprep.subr.mxu0 0.0
    %210 = vmatpush1.xpose.msra.mxu0 0.0
    %211 = vmatprep.subr.mxu0 0.0
    %212 = vmatpush1.xpose.msra.mxu0 0.0
    %213 = vmatprep.subr.mxu0 0.0
    %214 = vmatpush1.xpose.msra.mxu0 0.0
    %215 = vmatprep.subr.mxu0 0.0
    %216 = vmatpush1.xpose.msra.mxu0 0.0
    %217 = vmatprep.subr.mxu0 0.0
    %218 = vmatpush1.xpose.msra.mxu0 0.0
    %219 = vmatprep.subr.mxu0 0.0
    %220 = vmatpush1.xpose.msra.mxu0 0.0
    %221 = vmatprep.subr.mxu0 0.0
    %222 = vmatpush1.xpose.msra.mxu0 0.0
    %223 = vmatprep.subr.mxu0 0.0
    %224 = vmatpush1.xpose.msra.mxu0 0.0
    %225 = vmatprep.subr.mxu0 0.0
    %226 = vmatpush1.xpose.msra.mxu0 0.0
    %227 = vmatprep.subr.mxu0 0.0
    %228 = vmatpush1.xpose.msra.mxu0 0.0
    %229 = vmatprep.subr.mxu0 0.0
    %230 = vmatpush1.xpose.msra.mxu0 0.0
    %231 = vmatprep.subr.mxu0 0.0
    %232 = vmatpush1.xpose.msra.mxu0 0.0
    %233 = vmatprep.subr.mxu0 0.0
    %234 = vmatpush1.xpose.msra.mxu0 0.0
    %235 = vmatprep.subr.mxu0 0.0
    %236 = vmatpush1.xpose.msra.mxu0 0.0
    %237 = vmatprep.subr.mxu0 0.0
    %238 = vmatpush1.xpose.msra.mxu0 0.0
    %239 = vmatprep.subr.mxu0 0.0
    %240 = vmatpush1.xpose.msra.mxu0 0.0
    %241 = vmatprep.subr.mxu0 0.0
    %242 = vmatpush1.xpose.msra.mxu0 0.0
    %243 = vmatprep.subr.mxu0 0.0
    %244 = vmatpush1.xpose.msra.mxu0 0.0
    %245 = vmatprep.subr.mxu0 0.0
    %246 = vmatpush1.xpose.msra.mxu0 0.0
    %247 = vmatprep.subr.mxu0 0.0
    %248 = vmatpush1.xpose.msra.mxu0 0.0
    %249 = vmatprep.subr.mxu0 0.0
    %250 = vmatpush1.xpose.msra.mxu0 0.0
    %251 = vmatprep.subr.mxu0 0.0
    %252 = vmatpush1.xpose.msra.mxu0 0.0
    %253 = vmatprep.subr.mxu0 0.0
    %254 = vmatpush1.xpose.msra.mxu0 0.0
    %255 = vmatprep.subr.mxu0 0.0
    %256 = vmatpush1.xpose.msra.mxu0 0.0
    %257 = vmatprep.subr.mxu0 0.0
    %258 = vmatpush1.xpose.msra.mxu0 0.0
    %259 = vmatprep.subr.mxu0 0.0
    %260 = vmatpush1.xpose.msra.mxu0 0.0
    %261 = vmatprep.subr.mxu0 0.0
    %262 = vmatpush1.xpose.msra.mxu0 0.0
    %263 = vmatprep.mubr.f32.mxu0 0.0
    %264 = vmatmul.mubr.f32.gmra.mrb[0].mxu0 %v190
    %v265 = vpop.f32.mrb[0].mxu0
    %v266 = vadd.f32 %v178, %v265
    %v267 = vpop.f32.mrb[0].mxu0
    %268 = vmatprep.mubr.f32.mxu0 0.0
    %269 = vmatmul.mubr.f32.gmra.mrb[0].mxu0 %v193
    %v270 = vpop.f32.mrb[0].mxu0
    %v271 = vadd.f32 %v179, %v270
    %v272 = vpop.f32.mrb[0].mxu0
    %273 = vdwg.mxu0
    %vm274 = vcmask 80896
    %v275 = vsel %vm274, %v266, -inf
    %276 = vmax.xlane.f32.xlu0 %v275
    %v277 = vpop.xlane.xlu0 %276
    %vm278 = vcmask 74752
    %v279 = vsel %vm278, %v271, -inf
    %280 = vmax.xlane.f32.xlu0 %v279
    %v281 = vpop.xlane.xlu0 %280
    %v282 = vsub.f32 %v266, %v277
    %v283 = vsub.f32 %v271, %v281
    %v284 = vmul.f32 %v282, 1.442695
    %v285 = vpow.pop %v284
    %v286 = vmul.f32 %v283, 1.442695
    %v287 = vpow.pop %v286
    %v288 = vsel %vm274, %v285, 0.0
    %289 = vadd.xlane.f32.xlu0 %v288
    %v290 = vpop.xlane.xlu0 %289
    %v291 = vsel %vm278, %v287, 0.0
    %292 = vadd.xlane.f32.xlu0 %v291
    %v293 = vpop.xlane.xlu0 %292
    %v294 = vrcp.pop %v290
    %v295 = vrcp.pop %v293
    %v296 = vmul.f32 %v290, %v294
    %v297 = vmul.f32 %v293, %v295
    %v298 = vsub.f32 2.0, %v296
    %v299 = vsub.f32 2.0, %v297
    %v300 = vmul.f32 %v294, %v298
    %v301 = vmul.f32 %v295, %v299
    %v302 = vlog2.pop %v290
    %v303 = vmul.f32 %v302, 0.6931472
    %v304 = vlog2.pop %v293
    %v305 = vmul.f32 %v304, 0.6931472
    %v306 = vsub.f32 %v282, %v303
    %v307 = vsub.f32 %v283, %v305
    %v308 = vmul.f32 %v176, %v306
    %v309 = vmul.f32 %v177, %v307
    %v310 = vsel %vm274, %v308, 0.0
    %311 = vadd.xlane.f32.xlu0 %v310
    %v312 = vpop.xlane.xlu0 %311
    %v313 = vsel %vm278, %v309, 0.0
    %314 = vadd.xlane.f32.xlu0 %v313
    %v315 = vpop.xlane.xlu0 %314
    %v316 = vadd.f32 %v312, 0.0
    %v317 = vadd.f32 %v315, 0.0
    %vm318 = vcmp.ge.s32.totalorder %v181, 0
    %vm319 = vcmp.lt.s32.totalorder %v181, 8
    %vm320 = vmand %vm318, %vm319
    %321 = vrot.lane.b32.xlu0 %v166, 64
    %v322 = vpop.permute.xlu0 %321
    %323 = vrot.lane.b32.xlu0 %v171, 64
    %v324 = vpop.permute.xlu0 %323
    %v327 = vsel %vm320, %v322, 0.0
    %v328 = vsel %vm320, %v324, 0.0
    %v330 = vsel %vm274, %v285, 0
    %v333 = vsel %vm274, %v287, 0
    %vm335 = vcmask 1041408
    %v337 = vsel %vm335, %v328, 0
    %339 = vmatprep.subr.mxu0 0.0
    %340 = vmatpush1.msra.mxu0 %v327
    %341 = vmatprep.subr.mxu0 0.0
    %342 = vmatpush1.msra.mxu0 %v337
    %343 = vmatprep.subr.mxu0 0.0
    %344 = vmatpush1.msra.mxu0 0.0
    %345 = vmatprep.subr.mxu0 0.0
    %346 = vmatpush1.msra.mxu0 0.0
    %347 = vmatprep.subr.mxu0 0.0
    %348 = vmatpush1.msra.mxu0 0.0
    %349 = vmatprep.subr.mxu0 0.0
    %350 = vmatpush1.msra.mxu0 0.0
    %351 = vmatprep.subr.mxu0 0.0
    %352 = vmatpush1.msra.mxu0 0.0
    %353 = vmatprep.subr.mxu0 0.0
    %354 = vmatpush1.msra.mxu0 0.0
    %355 = vmatprep.subr.mxu0 0.0
    %356 = vmatpush1.msra.mxu0 0.0
    %357 = vmatprep.subr.mxu0 0.0
    %358 = vmatpush1.msra.mxu0 0.0
    %359 = vmatprep.subr.mxu0 0.0
    %360 = vmatpush1.msra.mxu0 0.0
    %361 = vmatprep.subr.mxu0 0.0
    %362 = vmatpush1.msra.mxu0 0.0
    %363 = vmatprep.subr.mxu0 0.0
    %364 = vmatpush1.msra.mxu0 0.0
    %365 = vmatprep.subr.mxu0 0.0
    %366 = vmatpush1.msra.mxu0 0.0
    %367 = vmatprep.subr.mxu0 0.0
    %368 = vmatpush1.msra.mxu0 0.0
    %369 = vmatprep.subr.mxu0 0.0
    %370 = vmatpush1.msra.mxu0 0.0
    %371 = vmatprep.subr.mxu0 0.0
    %372 = vmatpush1.msra.mxu0 0.0
    %373 = vmatprep.subr.mxu0 0.0
    %374 = vmatpush1.msra.mxu0 0.0
    %375 = vmatprep.subr.mxu0 0.0
    %376 = vmatpush1.msra.mxu0 0.0
    %377 = vmatprep.subr.mxu0 0.0
    %378 = vmatpush1.msra.mxu0 0.0
    %379 = vmatprep.subr.mxu0 0.0
    %380 = vmatpush1.msra.mxu0 0.0
    %381 = vmatprep.subr.mxu0 0.0
    %382 = vmatpush1.msra.mxu0 0.0
    %383 = vmatprep.subr.mxu0 0.0
    %384 = vmatpush1.msra.mxu0 0.0
    %385 = vmatprep.subr.mxu0 0.0
    %386 = vmatpush1.msra.mxu0 0.0
    %387 = vmatprep.subr.mxu0 0.0
    %388 = vmatpush1.msra.mxu0 0.0
    %389 = vmatprep.subr.mxu0 0.0
    %390 = vmatpush1.msra.mxu0 0.0
    %391 = vmatprep.subr.mxu0 0.0
    %392 = vmatpush1.msra.mxu0 0.0
    %393 = vmatprep.subr.mxu0 0.0
    %394 = vmatpush1.msra.mxu0 0.0
    %395 = vmatprep.subr.mxu0 0.0
    %396 = vmatpush1.msra.mxu0 0.0
    %397 = vmatprep.subr.mxu0 0.0
    %398 = vmatpush1.msra.mxu0 0.0
    %399 = vmatprep.subr.mxu0 0.0
    %400 = vmatpush1.msra.mxu0 0.0
    %401 = vmatprep.subr.mxu0 0.0
    %402 = vmatpush1.msra.mxu0 0.0
    %403 = vmatprep.mubr.f32.mxu0 0.0
    %404 = vmatmul.mubr.f32.gmra.mrb[0].mxu0 %v330
    %v405 = vpop.f32.mrb[0].mxu0
    %v406 = vadd.f32 0.0, %v405
    %v407 = vpop.f32.mrb[0].mxu0
    %408 = vmatprep.mubr.f32.mxu0 0.0
    %409 = vmatmul.mubr.f32.gmra.mrb[0].mxu0 %v333
    %v410 = vpop.f32.mrb[0].mxu0
    %v411 = vadd.f32 0.0, %v410
    %v412 = vpop.f32.mrb[0].mxu0
    %413 = vdwg.mxu0
    %v414 = vmul.f32 %v406, %v300
    %v415 = vmul.f32 %v411, %v301
    %v416 = vadd.f32 %v414, 0.0
    %v417 = vadd.f32 %v415, 0.0
    %418 = vrot.lane.b32.xlu0 %v174, 120
    %v419 = vpop.permute.xlu0 %418
    %420 = vrot.lane.b32.xlu0 %v175, 120
    %v421 = vpop.permute.xlu0 %420
    %422 = vrot.lane.b32.xlu0 %v166, 88
    %v423 = vpop.permute.xlu0 %422
    %424 = vrot.lane.b32.xlu0 %v171, 88
    %v425 = vpop.permute.xlu0 %424
    %v426 = vsel %vm188, %v419, 0
    %v428 = vsel %vm188, %v421, 0
    %v430 = vsel %vm188, %v423, 0
    %v432 = vsel %vm188, %v425, 0
    %434 = vmatprep.subr.mxu0 0.0
    %435 = vmatpush1.xpose.msra.mxu0 %v430
    %436 = vmatprep.subr.mxu0 0.0
    %437 = vmatpush1.xpose.msra.mxu0 %v432
    %438 = vmatprep.subr.mxu0 0.0
    %439 = vmatpush1.xpose.msra.mxu0 0.0
    %440 = vmatprep.subr.mxu0 0.0
    %441 = vmatpush1.xpose.msra.mxu0 0.0
    %442 = vmatprep.subr.mxu0 0.0
    %443 = vmatpush1.xpose.msra.mxu0 0.0
    %444 = vmatprep.subr.mxu0 0.0
    %445 = vmatpush1.xpose.msra.mxu0 0.0
    %446 = vmatprep.subr.mxu0 0.0
    %447 = vmatpush1.xpose.msra.mxu0 0.0
    %448 = vmatprep.subr.mxu0 0.0
    %449 = vmatpush1.xpose.msra.mxu0 0.0
    %450 = vmatprep.subr.mxu0 0.0
    %451 = vmatpush1.xpose.msra.mxu0 0.0
    %452 = vmatprep.subr.mxu0 0.0
    %453 = vmatpush1.xpose.msra.mxu0 0.0
    %454 = vmatprep.subr.mxu0 0.0
    %455 = vmatpush1.xpose.msra.mxu0 0.0
    %456 = vmatprep.subr.mxu0 0.0
    %457 = vmatpush1.xpose.msra.mxu0 0.0
    %458 = vmatprep.subr.mxu0 0.0
    %459 = vmatpush1.xpose.msra.mxu0 0.0
    %460 = vmatprep.subr.mxu0 0.0
    %461 = vmatpush1.xpose.msra.mxu0 0.0
    %462 = vmatprep.subr.mxu0 0.0
    %463 = vmatpush1.xpose.msra.mxu0 0.0
    %464 = vmatprep.subr.mxu0 0.0
    %465 = vmatpush1.xpose.msra.mxu0 0.0
    %466 = vmatprep.subr.mxu0 0.0
    %467 = vmatpush1.xpose.msra.mxu0 0.0
    %468 = vmatprep.subr.mxu0 0.0
    %469 = vmatpush1.xpose.msra.mxu0 0.0
    %470 = vmatprep.subr.mxu0 0.0
    %471 = vmatpush1.xpose.msra.mxu0 0.0
    %472 = vmatprep.subr.mxu0 0.0
    %473 = vmatpush1.xpose.msra.mxu0 0.0
    %474 = vmatprep.subr.mxu0 0.0
    %475 = vmatpush1.xpose.msra.mxu0 0.0
    %476 = vmatprep.subr.mxu0 0.0
    %477 = vmatpush1.xpose.msra.mxu0 0.0
    %478 = vmatprep.subr.mxu0 0.0
    %479 = vmatpush1.xpose.msra.mxu0 0.0
    %480 = vmatprep.subr.mxu0 0.0
    %481 = vmatpush1.xpose.msra.mxu0 0.0
    %482 = vmatprep.subr.mxu0 0.0
    %483 = vmatpush1.xpose.msra.mxu0 0.0
    %484 = vmatprep.subr.mxu0 0.0
    %485 = vmatpush1.xpose.msra.mxu0 0.0
    %486 = vmatprep.subr.mxu0 0.0
    %487 = vmatpush1.xpose.msra.mxu0 0.0
    %488 = vmatprep.subr.mxu0 0.0
    %489 = vmatpush1.xpose.msra.mxu0 0.0
    %490 = vmatprep.subr.mxu0 0.0
    %491 = vmatpush1.xpose.msra.mxu0 0.0
    %492 = vmatprep.subr.mxu0 0.0
    %493 = vmatpush1.xpose.msra.mxu0 0.0
    %494 = vmatprep.subr.mxu0 0.0
    %495 = vmatpush1.xpose.msra.mxu0 0.0
    %496 = vmatprep.subr.mxu0 0.0
    %497 = vmatpush1.xpose.msra.mxu0 0.0
    %498 = vmatprep.mubr.f32.mxu0 0.0
    %499 = vmatmul.mubr.f32.gmra.mrb[0].mxu0 %v426
    %v500 = vpop.f32.mrb[0].mxu0
    %v501 = vadd.f32 %v178, %v500
    %v502 = vpop.f32.mrb[0].mxu0
    %503 = vmatprep.mubr.f32.mxu0 0.0
    %504 = vmatmul.mubr.f32.gmra.mrb[0].mxu0 %v428
    %v505 = vpop.f32.mrb[0].mxu0
    %v506 = vadd.f32 %v179, %v505
    %v507 = vpop.f32.mrb[0].mxu0
    %508 = vdwg.mxu0
    %v509 = vsel %vm274, %v501, -inf
    %510 = vmax.xlane.f32.xlu0 %v509
    %v511 = vpop.xlane.xlu0 %510
    %v512 = vsel %vm278, %v506, -inf
    %513 = vmax.xlane.f32.xlu0 %v512
    %v514 = vpop.xlane.xlu0 %513
    %v515 = vsub.f32 %v501, %v511
    %v516 = vsub.f32 %v506, %v514
    %v517 = vmul.f32 %v515, 1.442695
    %v518 = vpow.pop %v517
    %v519 = vmul.f32 %v516, 1.442695
    %v520 = vpow.pop %v519
    %v521 = vsel %vm274, %v518, 0.0
    %522 = vadd.xlane.f32.xlu0 %v521
    %v523 = vpop.xlane.xlu0 %522
    %v524 = vsel %vm278, %v520, 0.0
    %525 = vadd.xlane.f32.xlu0 %v524
    %v526 = vpop.xlane.xlu0 %525
    %v527 = vrcp.pop %v523
    %v528 = vrcp.pop %v526
    %v529 = vmul.f32 %v523, %v527
    %v530 = vmul.f32 %v526, %v528
    %v531 = vsub.f32 2.0, %v529
    %v532 = vsub.f32 2.0, %v530
    %v533 = vmul.f32 %v527, %v531
    %v534 = vmul.f32 %v528, %v532
    %v535 = vlog2.pop %v523
    %v536 = vmul.f32 %v535, 0.6931472
    %v537 = vlog2.pop %v526
    %v538 = vmul.f32 %v537, 0.6931472
    %v539 = vsub.f32 %v515, %v536
    %v540 = vsub.f32 %v516, %v538
    %v541 = vmul.f32 %v176, %v539
    %v542 = vmul.f32 %v177, %v540
    %v543 = vsel %vm274, %v541, 0.0
    %544 = vadd.xlane.f32.xlu0 %v543
    %v545 = vpop.xlane.xlu0 %544
    %v546 = vsel %vm278, %v542, 0.0
    %547 = vadd.xlane.f32.xlu0 %v546
    %v548 = vpop.xlane.xlu0 %547
    %v549 = vadd.f32 %v316, %v545
    %v550 = vadd.f32 %v317, %v548
    %vm551 = vcmp.ge.s32.totalorder %v181, 8
    %vm552 = vcmp.lt.s32.totalorder %v181, 16
    %vm553 = vmand %vm551, %vm552
    %v554 = vsel %vm553, %v322, 0.0
    %v555 = vsel %vm553, %v324, 0.0
    %v557 = vsel %vm274, %v518, 0
    %v560 = vsel %vm274, %v520, 0
    %v563 = vsel %vm335, %v555, 0
    %565 = vmatprep.subr.mxu0 0.0
    %566 = vmatpush1.msra.mxu0 %v554
    %567 = vmatprep.subr.mxu0 0.0
    %568 = vmatpush1.msra.mxu0 %v563
    %569 = vmatprep.subr.mxu0 0.0
    %570 = vmatpush1.msra.mxu0 0.0
    %571 = vmatprep.subr.mxu0 0.0
    %572 = vmatpush1.msra.mxu0 0.0
    %573 = vmatprep.subr.mxu0 0.0
    %574 = vmatpush1.msra.mxu0 0.0
    %575 = vmatprep.subr.mxu0 0.0
    %576 = vmatpush1.msra.mxu0 0.0
    %577 = vmatprep.subr.mxu0 0.0
    %578 = vmatpush1.msra.mxu0 0.0
    %579 = vmatprep.subr.mxu0 0.0
    %580 = vmatpush1.msra.mxu0 0.0
    %581 = vmatprep.subr.mxu0 0.0
    %582 = vmatpush1.msra.mxu0 0.0
    %583 = vmatprep.subr.mxu0 0.0
    %584 = vmatpush1.msra.mxu0 0.0
    %585 = vmatprep.subr.mxu0 0.0
    %586 = vmatpush1.msra.mxu0 0.0
    %587 = vmatprep.subr.mxu0 0.0
    %588 = vmatpush1.msra.mxu0 0.0
    %589 = vmatprep.subr.mxu0 0.0
    %590 = vmatpush1.msra.mxu0 0.0
    %591 = vmatprep.subr.mxu0 0.0
    %592 = vmatpush1.msra.mxu0 0.0
    %593 = vmatprep.subr.mxu0 0.0
    %594 = vmatpush1.msra.mxu0 0.0
    %595 = vmatprep.subr.mxu0 0.0
    %596 = vmatpush1.msra.mxu0 0.0
    %597 = vmatprep.subr.mxu0 0.0
    %598 = vmatpush1.msra.mxu0 0.0
    %599 = vmatprep.subr.mxu0 0.0
    %600 = vmatpush1.msra.mxu0 0.0
    %601 = vmatprep.subr.mxu0 0.0
    %602 = vmatpush1.msra.mxu0 0.0
    %603 = vmatprep.subr.mxu0 0.0
    %604 = vmatpush1.msra.mxu0 0.0
    %605 = vmatprep.subr.mxu0 0.0
    %606 = vmatpush1.msra.mxu0 0.0
    %607 = vmatprep.subr.mxu0 0.0
    %608 = vmatpush1.msra.mxu0 0.0
    %609 = vmatprep.subr.mxu0 0.0
    %610 = vmatpush1.msra.mxu0 0.0
    %611 = vmatprep.subr.mxu0 0.0
    %612 = vmatpush1.msra.mxu0 0.0
    %613 = vmatprep.subr.mxu0 0.0
    %614 = vmatpush1.msra.mxu0 0.0
    %615 = vmatprep.subr.mxu0 0.0
    %616 = vmatpush1.msra.mxu0 0.0
    %617 = vmatprep.subr.mxu0 0.0
    %618 = vmatpush1.msra.mxu0 0.0
    %619 = vmatprep.subr.mxu0 0.0
    %620 = vmatpush1.msra.mxu0 0.0
    %621 = vmatprep.subr.mxu0 0.0
    %622 = vmatpush1.msra.mxu0 0.0
    %623 = vmatprep.subr.mxu0 0.0
    %624 = vmatpush1.msra.mxu0 0.0
    %625 = vmatprep.subr.mxu0 0.0
    %626 = vmatpush1.msra.mxu0 0.0
    %627 = vmatprep.subr.mxu0 0.0
    %628 = vmatpush1.msra.mxu0 0.0
    %629 = vmatprep.mubr.f32.mxu0 0.0
    %630 = vmatmul.mubr.f32.gmra.mrb[0].mxu0 %v557
    %v631 = vpop.f32.mrb[0].mxu0
    %v632 = vadd.f32 0.0, %v631
    %v633 = vpop.f32.mrb[0].mxu0
    %634 = vmatprep.mubr.f32.mxu0 0.0
    %635 = vmatmul.mubr.f32.gmra.mrb[0].mxu0 %v560
    %v636 = vpop.f32.mrb[0].mxu0
    %v637 = vadd.f32 0.0, %v636
    %v638 = vpop.f32.mrb[0].mxu0
    %639 = vdwg.mxu0
    %v640 = vmul.f32 %v632, %v533
    %v641 = vmul.f32 %v637, %v534
    %v642 = vadd.f32 %v416, %v640
    %v643 = vadd.f32 %v417, %v641
    %644 = vrot.lane.b32.xlu0 %v174, 112
    %v645 = vpop.permute.xlu0 %644
    %646 = vrot.lane.b32.xlu0 %v175, 112
    %v647 = vpop.permute.xlu0 %646
    %648 = vrot.lane.b32.xlu0 %v166, 80
    %v649 = vpop.permute.xlu0 %648
    %650 = vrot.lane.b32.xlu0 %v171, 80
    %v651 = vpop.permute.xlu0 %650
    %v652 = vsel %vm188, %v645, 0
    %v654 = vsel %vm188, %v647, 0
    %v656 = vsel %vm188, %v649, 0
    %v658 = vsel %vm188, %v651, 0
    %660 = vmatprep.subr.mxu0 0.0
    %661 = vmatpush1.xpose.msra.mxu0 %v656
    %662 = vmatprep.subr.mxu0 0.0
    %663 = vmatpush1.xpose.msra.mxu0 %v658
    %664 = vmatprep.subr.mxu0 0.0
    %665 = vmatpush1.xpose.msra.mxu0 0.0
    %666 = vmatprep.subr.mxu0 0.0
    %667 = vmatpush1.xpose.msra.mxu0 0.0
    %668 = vmatprep.subr.mxu0 0.0
    %669 = vmatpush1.xpose.msra.mxu0 0.0
    %670 = vmatprep.subr.mxu0 0.0
    %671 = vmatpush1.xpose.msra.mxu0 0.0
    %672 = vmatprep.subr.mxu0 0.0
    %673 = vmatpush1.xpose.msra.mxu0 0.0
    %674 = vmatprep.subr.mxu0 0.0
    %675 = vmatpush1.xpose.msra.mxu0 0.0
    %676 = vmatprep.subr.mxu0 0.0
    %677 = vmatpush1.xpose.msra.mxu0 0.0
    %678 = vmatprep.subr.mxu0 0.0
    %679 = vmatpush1.xpose.msra.mxu0 0.0
    %680 = vmatprep.subr.mxu0 0.0
    %681 = vmatpush1.xpose.msra.mxu0 0.0
    %682 = vmatprep.subr.mxu0 0.0
    %683 = vmatpush1.xpose.msra.mxu0 0.0
    %684 = vmatprep.subr.mxu0 0.0
    %685 = vmatpush1.xpose.msra.mxu0 0.0
    %686 = vmatprep.subr.mxu0 0.0
    %687 = vmatpush1.xpose.msra.mxu0 0.0
    %688 = vmatprep.subr.mxu0 0.0
    %689 = vmatpush1.xpose.msra.mxu0 0.0
    %690 = vmatprep.subr.mxu0 0.0
    %691 = vmatpush1.xpose.msra.mxu0 0.0
    %692 = vmatprep.subr.mxu0 0.0
    %693 = vmatpush1.xpose.msra.mxu0 0.0
    %694 = vmatprep.subr.mxu0 0.0
    %695 = vmatpush1.xpose.msra.mxu0 0.0
    %696 = vmatprep.subr.mxu0 0.0
    %697 = vmatpush1.xpose.msra.mxu0 0.0
    %698 = vmatprep.subr.mxu0 0.0
    %699 = vmatpush1.xpose.msra.mxu0 0.0
    %700 = vmatprep.subr.mxu0 0.0
    %701 = vmatpush1.xpose.msra.mxu0 0.0
    %702 = vmatprep.subr.mxu0 0.0
    %703 = vmatpush1.xpose.msra.mxu0 0.0
    %704 = vmatprep.subr.mxu0 0.0
    %705 = vmatpush1.xpose.msra.mxu0 0.0
    %706 = vmatprep.subr.mxu0 0.0
    %707 = vmatpush1.xpose.msra.mxu0 0.0
    %708 = vmatprep.subr.mxu0 0.0
    %709 = vmatpush1.xpose.msra.mxu0 0.0
    %710 = vmatprep.subr.mxu0 0.0
    %711 = vmatpush1.xpose.msra.mxu0 0.0
    %712 = vmatprep.subr.mxu0 0.0
    %713 = vmatpush1.xpose.msra.mxu0 0.0
    %714 = vmatprep.subr.mxu0 0.0
    %715 = vmatpush1.xpose.msra.mxu0 0.0
    %716 = vmatprep.subr.mxu0 0.0
    %717 = vmatpush1.xpose.msra.mxu0 0.0
    %718 = vmatprep.subr.mxu0 0.0
    %719 = vmatpush1.xpose.msra.mxu0 0.0
    %720 = vmatprep.subr.mxu0 0.0
    %721 = vmatpush1.xpose.msra.mxu0 0.0
    %722 = vmatprep.subr.mxu0 0.0
    %723 = vmatpush1.xpose.msra.mxu0 0.0
    %724 = vmatprep.mubr.f32.mxu0 0.0
    %725 = vmatmul.mubr.f32.gmra.mrb[0].mxu0 %v652
    %v726 = vpop.f32.mrb[0].mxu0
    %v727 = vadd.f32 %v178, %v726
    %v728 = vpop.f32.mrb[0].mxu0
    %729 = vmatprep.mubr.f32.mxu0 0.0
    %730 = vmatmul.mubr.f32.gmra.mrb[0].mxu0 %v654
    %v731 = vpop.f32.mrb[0].mxu0
    %v732 = vadd.f32 %v179, %v731
    %v733 = vpop.f32.mrb[0].mxu0
    %734 = vdwg.mxu0
    %v735 = vsel %vm274, %v727, -inf
    %736 = vmax.xlane.f32.xlu0 %v735
    %v737 = vpop.xlane.xlu0 %736
    %v738 = vsel %vm278, %v732, -inf
    %739 = vmax.xlane.f32.xlu0 %v738
    %v740 = vpop.xlane.xlu0 %739
    %v741 = vsub.f32 %v727, %v737
    %v742 = vsub.f32 %v732, %v740
    %v743 = vmul.f32 %v741, 1.442695
    %v744 = vpow.pop %v743
    %v745 = vmul.f32 %v742, 1.442695
    %v746 = vpow.pop %v745
    %v747 = vsel %vm274, %v744, 0.0
    %748 = vadd.xlane.f32.xlu0 %v747
    %v749 = vpop.xlane.xlu0 %748
    %v750 = vsel %vm278, %v746, 0.0
    %751 = vadd.xlane.f32.xlu0 %v750
    %v752 = vpop.xlane.xlu0 %751
    %v753 = vrcp.pop %v749
    %v754 = vrcp.pop %v752
    %v755 = vmul.f32 %v749, %v753
    %v756 = vmul.f32 %v752, %v754
    %v757 = vsub.f32 2.0, %v755
    %v758 = vsub.f32 2.0, %v756
    %v759 = vmul.f32 %v753, %v757
    %v760 = vmul.f32 %v754, %v758
    %v761 = vlog2.pop %v749
    %v762 = vmul.f32 %v761, 0.6931472
    %v763 = vlog2.pop %v752
    %v764 = vmul.f32 %v763, 0.6931472
    %v765 = vsub.f32 %v741, %v762
    %v766 = vsub.f32 %v742, %v764
    %v767 = vmul.f32 %v176, %v765
    %v768 = vmul.f32 %v177, %v766
    %v769 = vsel %vm274, %v767, 0.0
    %770 = vadd.xlane.f32.xlu0 %v769
    %v771 = vpop.xlane.xlu0 %770
    %v772 = vsel %vm278, %v768, 0.0
    %773 = vadd.xlane.f32.xlu0 %v772
    %v774 = vpop.xlane.xlu0 %773
    %v775 = vadd.f32 %v549, %v771
    %v776 = vadd.f32 %v550, %v774
    %vm777 = vcmp.ge.s32.totalorder %v181, 16
    %vm778 = vcmp.lt.s32.totalorder %v181, 24
    %vm779 = vmand %vm777, %vm778
    %v780 = vsel %vm779, %v322, 0.0
    %v781 = vsel %vm779, %v324, 0.0
    %v783 = vsel %vm274, %v744, 0
    %v786 = vsel %vm274, %v746, 0
    %v789 = vsel %vm335, %v781, 0
    %791 = vmatprep.subr.mxu0 0.0
    %792 = vmatpush1.msra.mxu0 %v780
    %793 = vmatprep.subr.mxu0 0.0
    %794 = vmatpush1.msra.mxu0 %v789
    %795 = vmatprep.subr.mxu0 0.0
    %796 = vmatpush1.msra.mxu0 0.0
    %797 = vmatprep.subr.mxu0 0.0
    %798 = vmatpush1.msra.mxu0 0.0
    %799 = vmatprep.subr.mxu0 0.0
    %800 = vmatpush1.msra.mxu0 0.0
    %801 = vmatprep.subr.mxu0 0.0
    %802 = vmatpush1.msra.mxu0 0.0
    %803 = vmatprep.subr.mxu0 0.0
    %804 = vmatpush1.msra.mxu0 0.0
    %805 = vmatprep.subr.mxu0 0.0
    %806 = vmatpush1.msra.mxu0 0.0
    %807 = vmatprep.subr.mxu0 0.0
    %808 = vmatpush1.msra.mxu0 0.0
    %809 = vmatprep.subr.mxu0 0.0
    %810 = vmatpush1.msra.mxu0 0.0
    %811 = vmatprep.subr.mxu0 0.0
    %812 = vmatpush1.msra.mxu0 0.0
    %813 = vmatprep.subr.mxu0 0.0
    %814 = vmatpush1.msra.mxu0 0.0
    %815 = vmatprep.subr.mxu0 0.0
    %816 = vmatpush1.msra.mxu0 0.0
    %817 = vmatprep.subr.mxu0 0.0
    %818 = vmatpush1.msra.mxu0 0.0
    %819 = vmatprep.subr.mxu0 0.0
    %820 = vmatpush1.msra.mxu0 0.0
    %821 = vmatprep.subr.mxu0 0.0
    %822 = vmatpush1.msra.mxu0 0.0
    %823 = vmatprep.subr.mxu0 0.0
    %824 = vmatpush1.msra.mxu0 0.0
    %825 = vmatprep.subr.mxu0 0.0
    %826 = vmatpush1.msra.mxu0 0.0
    %827 = vmatprep.subr.mxu0 0.0
    %828 = vmatpush1.msra.mxu0 0.0
    %829 = vmatprep.subr.mxu0 0.0
    %830 = vmatpush1.msra.mxu0 0.0
    %831 = vmatprep.subr.mxu0 0.0
    %832 = vmatpush1.msra.mxu0 0.0
    %833 = vmatprep.subr.mxu0 0.0
    %834 = vmatpush1.msra.mxu0 0.0
    %835 = vmatprep.subr.mxu0 0.0
    %836 = vmatpush1.msra.mxu0 0.0
    %837 = vmatprep.subr.mxu0 0.0
    %838 = vmatpush1.msra.mxu0 0.0
    %839 = vmatprep.subr.mxu0 0.0
    %840 = vmatpush1.msra.mxu0 0.0
    %841 = vmatprep.subr.mxu0 0.0
    %842 = vmatpush1.msra.mxu0 0.0
    %843 = vmatprep.subr.mxu0 0.0
    %844 = vmatpush1.msra.mxu0 0.0
    %845 = vmatprep.subr.mxu0 0.0
    %846 = vmatpush1.msra.mxu0 0.0
    %847 = vmatprep.subr.mxu0 0.0
    %848 = vmatpush1.msra.mxu0 0.0
    %849 = vmatprep.subr.mxu0 0.0
    %850 = vmatpush1.msra.mxu0 0.0
    %851 = vmatprep.subr.mxu0 0.0
    %852 = vmatpush1.msra.mxu0 0.0
    %853 = vmatprep.subr.mxu0 0.0
    %854 = vmatpush1.msra.mxu0 0.0
    %855 = vmatprep.mubr.f32.mxu0 0.0
    %856 = vmatmul.mubr.f32.gmra.mrb[0].mxu0 %v783
    %v857 = vpop.f32.mrb[0].mxu0
    %v858 = vadd.f32 0.0, %v857
    %v859 = vpop.f32.mrb[0].mxu0
    %860 = vmatprep.mubr.f32.mxu0 0.0
    %861 = vmatmul.mubr.f32.gmra.mrb[0].mxu0 %v786
    %v862 = vpop.f32.mrb[0].mxu0
    %v863 = vadd.f32 0.0, %v862
    %v864 = vpop.f32.mrb[0].mxu0
    %865 = vdwg.mxu0
    %v866 = vmul.f32 %v858, %v759
    %v867 = vmul.f32 %v863, %v760
    %v868 = vadd.f32 %v642, %v866
    %v869 = vadd.f32 %v643, %v867
    %870 = vrot.lane.b32.xlu0 %v174, 104
    %v871 = vpop.permute.xlu0 %870
    %872 = vrot.lane.b32.xlu0 %v175, 104
    %v873 = vpop.permute.xlu0 %872
    %874 = vrot.lane.b32.xlu0 %v166, 72
    %v875 = vpop.permute.xlu0 %874
    %876 = vrot.lane.b32.xlu0 %v171, 72
    %v877 = vpop.permute.xlu0 %876
    %v878 = vsel %vm188, %v871, 0
    %v880 = vsel %vm188, %v873, 0
    %v882 = vsel %vm188, %v875, 0
    %v884 = vsel %vm188, %v877, 0
    %886 = vmatprep.subr.mxu0 0.0
    %887 = vmatpush1.xpose.msra.mxu0 %v882
    %888 = vmatprep.subr.mxu0 0.0
    %889 = vmatpush1.xpose.msra.mxu0 %v884
    %890 = vmatprep.subr.mxu0 0.0
    %891 = vmatpush1.xpose.msra.mxu0 0.0
    %892 = vmatprep.subr.mxu0 0.0
    %893 = vmatpush1.xpose.msra.mxu0 0.0
    %894 = vmatprep.subr.mxu0 0.0
    %895 = vmatpush1.xpose.msra.mxu0 0.0
    %896 = vmatprep.subr.mxu0 0.0
    %897 = vmatpush1.xpose.msra.mxu0 0.0
    %898 = vmatprep.subr.mxu0 0.0
    %899 = vmatpush1.xpose.msra.mxu0 0.0
    %900 = vmatprep.subr.mxu0 0.0
    %901 = vmatpush1.xpose.msra.mxu0 0.0
    %902 = vmatprep.subr.mxu0 0.0
    %903 = vmatpush1.xpose.msra.mxu0 0.0
    %904 = vmatprep.subr.mxu0 0.0
    %905 = vmatpush1.xpose.msra.mxu0 0.0
    %906 = vmatprep.subr.mxu0 0.0
    %907 = vmatpush1.xpose.msra.mxu0 0.0
    %908 = vmatprep.subr.mxu0 0.0
    %909 = vmatpush1.xpose.msra.mxu0 0.0
    %910 = vmatprep.subr.mxu0 0.0
    %911 = vmatpush1.xpose.msra.mxu0 0.0
    %912 = vmatprep.subr.mxu0 0.0
    %913 = vmatpush1.xpose.msra.mxu0 0.0
    %914 = vmatprep.subr.mxu0 0.0
    %915 = vmatpush1.xpose.msra.mxu0 0.0
    %916 = vmatprep.subr.mxu0 0.0
    %917 = vmatpush1.xpose.msra.mxu0 0.0
    %918 = vmatprep.subr.mxu0 0.0
    %919 = vmatpush1.xpose.msra.mxu0 0.0
    %920 = vmatprep.subr.mxu0 0.0
    %921 = vmatpush1.xpose.msra.mxu0 0.0
    %922 = vmatprep.subr.mxu0 0.0
    %923 = vmatpush1.xpose.msra.mxu0 0.0
    %924 = vmatprep.subr.mxu0 0.0
    %925 = vmatpush1.xpose.msra.mxu0 0.0
    %926 = vmatprep.subr.mxu0 0.0
    %927 = vmatpush1.xpose.msra.mxu0 0.0
    %928 = vmatprep.subr.mxu0 0.0
    %929 = vmatpush1.xpose.msra.mxu0 0.0
    %930 = vmatprep.subr.mxu0 0.0
    %931 = vmatpush1.xpose.msra.mxu0 0.0
    %932 = vmatprep.subr.mxu0 0.0
    %933 = vmatpush1.xpose.msra.mxu0 0.0
    %934 = vmatprep.subr.mxu0 0.0
    %935 = vmatpush1.xpose.msra.mxu0 0.0
    %936 = vmatprep.subr.mxu0 0.0
    %937 = vmatpush1.xpose.msra.mxu0 0.0
    %938 = vmatprep.subr.mxu0 0.0
    %939 = vmatpush1.xpose.msra.mxu0 0.0
    %940 = vmatprep.subr.mxu0 0.0
    %941 = vmatpush1.xpose.msra.mxu0 0.0
    %942 = vmatprep.subr.mxu0 0.0
    %943 = vmatpush1.xpose.msra.mxu0 0.0
    %944 = vmatprep.subr.mxu0 0.0
    %945 = vmatpush1.xpose.msra.mxu0 0.0
    %946 = vmatprep.subr.mxu0 0.0
    %947 = vmatpush1.xpose.msra.mxu0 0.0
    %948 = vmatprep.subr.mxu0 0.0
    %949 = vmatpush1.xpose.msra.mxu0 0.0
    %950 = vmatprep.mubr.f32.mxu0 0.0
    %951 = vmatmul.mubr.f32.gmra.mrb[0].mxu0 %v878
    %v952 = vpop.f32.mrb[0].mxu0
    %v953 = vadd.f32 %v178, %v952
    %v954 = vpop.f32.mrb[0].mxu0
    %955 = vmatprep.mubr.f32.mxu0 0.0
    %956 = vmatmul.mubr.f32.gmra.mrb[0].mxu0 %v880
    %v957 = vpop.f32.mrb[0].mxu0
    %v958 = vadd.f32 %v179, %v957
    %v959 = vpop.f32.mrb[0].mxu0
    %960 = vdwg.mxu0
    %v961 = vsel %vm274, %v953, -inf
    %962 = vmax.xlane.f32.xlu0 %v961
    %v963 = vpop.xlane.xlu0 %962
    %v964 = vsel %vm278, %v958, -inf
    %965 = vmax.xlane.f32.xlu0 %v964
    %v966 = vpop.xlane.xlu0 %965
    %v967 = vsub.f32 %v953, %v963
    %v968 = vsub.f32 %v958, %v966
    %v969 = vmul.f32 %v967, 1.442695
    %v970 = vpow.pop %v969
    %v971 = vmul.f32 %v968, 1.442695
    %v972 = vpow.pop %v971
    %v973 = vsel %vm274, %v970, 0.0
    %974 = vadd.xlane.f32.xlu0 %v973
    %v975 = vpop.xlane.xlu0 %974
    %v976 = vsel %vm278, %v972, 0.0
    %977 = vadd.xlane.f32.xlu0 %v976
    %v978 = vpop.xlane.xlu0 %977
    %v979 = vrcp.pop %v975
    %v980 = vrcp.pop %v978
    %v981 = vmul.f32 %v975, %v979
    %v982 = vmul.f32 %v978, %v980
    %v983 = vsub.f32 2.0, %v981
    %v984 = vsub.f32 2.0, %v982
    %v985 = vmul.f32 %v979, %v983
    %v986 = vmul.f32 %v980, %v984
    %v987 = vlog2.pop %v975
    %v988 = vmul.f32 %v987, 0.6931472
    %v989 = vlog2.pop %v978
    %v990 = vmul.f32 %v989, 0.6931472
    %v991 = vsub.f32 %v967, %v988
    %v992 = vsub.f32 %v968, %v990
    %v993 = vmul.f32 %v176, %v991
    %v994 = vmul.f32 %v177, %v992
    %v995 = vsel %vm274, %v993, 0.0
    %996 = vadd.xlane.f32.xlu0 %v995
    %v997 = vpop.xlane.xlu0 %996
    %v998 = vsel %vm278, %v994, 0.0
    %999 = vadd.xlane.f32.xlu0 %v998
    %v1000 = vpop.xlane.xlu0 %999
    %v1001 = vadd.f32 %v775, %v997
    %v1002 = vadd.f32 %v776, %v1000
    %vm1003 = vcmp.ge.s32.totalorder %v181, 24
    %vm1004 = vcmp.lt.s32.totalorder %v181, 32
    %vm1005 = vmand %vm1003, %vm1004
    %v1006 = vsel %vm1005, %v322, 0.0
    %v1007 = vsel %vm1005, %v324, 0.0
    %v1009 = vsel %vm274, %v970, 0
    %v1012 = vsel %vm274, %v972, 0
    %v1015 = vsel %vm335, %v1007, 0
    %1017 = vmatprep.subr.mxu0 0.0
    %1018 = vmatpush1.msra.mxu0 %v1006
    %1019 = vmatprep.subr.mxu0 0.0
    %1020 = vmatpush1.msra.mxu0 %v1015
    %1021 = vmatprep.subr.mxu0 0.0
    %1022 = vmatpush1.msra.mxu0 0.0
    %1023 = vmatprep.subr.mxu0 0.0
    %1024 = vmatpush1.msra.mxu0 0.0
    %1025 = vmatprep.subr.mxu0 0.0
    %1026 = vmatpush1.msra.mxu0 0.0
    %1027 = vmatprep.subr.mxu0 0.0
    %1028 = vmatpush1.msra.mxu0 0.0
    %1029 = vmatprep.subr.mxu0 0.0
    %1030 = vmatpush1.msra.mxu0 0.0
    %1031 = vmatprep.subr.mxu0 0.0
    %1032 = vmatpush1.msra.mxu0 0.0
    %1033 = vmatprep.subr.mxu0 0.0
    %1034 = vmatpush1.msra.mxu0 0.0
    %1035 = vmatprep.subr.mxu0 0.0
    %1036 = vmatpush1.msra.mxu0 0.0
    %1037 = vmatprep.subr.mxu0 0.0
    %1038 = vmatpush1.msra.mxu0 0.0
    %1039 = vmatprep.subr.mxu0 0.0
    %1040 = vmatpush1.msra.mxu0 0.0
    %1041 = vmatprep.subr.mxu0 0.0
    %1042 = vmatpush1.msra.mxu0 0.0
    %1043 = vmatprep.subr.mxu0 0.0
    %1044 = vmatpush1.msra.mxu0 0.0
    %1045 = vmatprep.subr.mxu0 0.0
    %1046 = vmatpush1.msra.mxu0 0.0
    %1047 = vmatprep.subr.mxu0 0.0
    %1048 = vmatpush1.msra.mxu0 0.0
    %1049 = vmatprep.subr.mxu0 0.0
    %1050 = vmatpush1.msra.mxu0 0.0
    %1051 = vmatprep.subr.mxu0 0.0
    %1052 = vmatpush1.msra.mxu0 0.0
    %1053 = vmatprep.subr.mxu0 0.0
    %1054 = vmatpush1.msra.mxu0 0.0
    %1055 = vmatprep.subr.mxu0 0.0
    %1056 = vmatpush1.msra.mxu0 0.0
    %1057 = vmatprep.subr.mxu0 0.0
    %1058 = vmatpush1.msra.mxu0 0.0
    %1059 = vmatprep.subr.mxu0 0.0
    %1060 = vmatpush1.msra.mxu0 0.0
    %1061 = vmatprep.subr.mxu0 0.0
    %1062 = vmatpush1.msra.mxu0 0.0
    %1063 = vmatprep.subr.mxu0 0.0
    %1064 = vmatpush1.msra.mxu0 0.0
    %1065 = vmatprep.subr.mxu0 0.0
    %1066 = vmatpush1.msra.mxu0 0.0
    %1067 = vmatprep.subr.mxu0 0.0
    %1068 = vmatpush1.msra.mxu0 0.0
    %1069 = vmatprep.subr.mxu0 0.0
    %1070 = vmatpush1.msra.mxu0 0.0
    %1071 = vmatprep.subr.mxu0 0.0
    %1072 = vmatpush1.msra.mxu0 0.0
    %1073 = vmatprep.subr.mxu0 0.0
    %1074 = vmatpush1.msra.mxu0 0.0
    %1075 = vmatprep.subr.mxu0 0.0
    %1076 = vmatpush1.msra.mxu0 0.0
    %1077 = vmatprep.subr.mxu0 0.0
    %1078 = vmatpush1.msra.mxu0 0.0
    %1079 = vmatprep.subr.mxu0 0.0
    %1080 = vmatpush1.msra.mxu0 0.0
    %1081 = vmatprep.mubr.f32.mxu0 0.0
    %1082 = vmatmul.mubr.f32.gmra.mrb[0].mxu0 %v1009
    %v1083 = vpop.f32.mrb[0].mxu0
    %v1084 = vadd.f32 0.0, %v1083
    %v1085 = vpop.f32.mrb[0].mxu0
    %1086 = vmatprep.mubr.f32.mxu0 0.0
    %1087 = vmatmul.mubr.f32.gmra.mrb[0].mxu0 %v1012
    %v1088 = vpop.f32.mrb[0].mxu0
    %v1089 = vadd.f32 0.0, %v1088
    %v1090 = vpop.f32.mrb[0].mxu0
    %1091 = vdwg.mxu0
    %v1092 = vmul.f32 %v1084, %v985
    %v1093 = vmul.f32 %v1089, %v986
    %v1094 = vadd.f32 %v868, %v1092
    %v1095 = vadd.f32 %v869, %v1093
    %1096 = vst.msk [vmem:[#allocation10] sm:$0xff] %vm92, %v1094
    %vm1097 = vcmask 254976
    %1098 = vst.msk [vmem:[#allocation10 + $0x8] sm:$0x3] %vm1097, %v1095
    %v1099 = vsel %vm335, %v1002, 0.0
    %v1100 = vadd.f32 %v1001, %v1099
    %v1101 = vrot.slane %v1100, 4
    %v1102 = vadd.f32 %v1100, %v1101
    %v1103 = vrot.slane %v1102, 2
    %v1104 = vadd.f32 %v1102, %v1103
    %v1105 = vrot.slane %v1104, 1
    %v1106 = vadd.f32 %v1104, %v1105
    %v1107 = vmul.f32 %v1106, 0.1
    %v1108 = vsub.f32 -4.570022, %v1107
    %vm1109 = vcmask 0
    %1110 = vst.msk [vmem:[#allocation11] sm:$0x1] %vm1109, %v1108
    // Predicated region
    $region38: #{tpu_custom_call.1} parent=1 // pred_check
      _
    $region39: #{tpu_custom_call.1} parent=1 // pred_check_branch
      %1112 = sbr.rel (0) target = $region41
    $region40: #{tpu_custom_call.1} parent=1 // pred_region
      %s1114 = ssub.s32 256, 256
      %1115 = vsyncadd [#allocation4], %s1114
      %s1116 = sshll.u32 [#allocation10], 4
      %s1117 = int_to_ptr.vmem [resolvable:$true] %s1116
      %1122 = dma.vmem_to_hbm [thread:$0]  %s1117, 256, %s5, [#allocation4], 128, 128, 8
    $region41: #{tpu_custom_call.1} parent=1 // pred_fallthru
      _
    // Predicated region
    $region42: #{tpu_custom_call.1} parent=1 // pred_check
      _
    $region43: #{tpu_custom_call.1} parent=1 // pred_check_branch
      %1124 = sbr.rel (0) target = $region45
    $region44: #{tpu_custom_call.1} parent=1 // pred_region
      %s1126 = ssub.s32 16, 16
      %1127 = vsyncadd [#allocation12], %s1126
      %s1129 = sshll.u32 [#allocation11], 4
      %s1130 = int_to_ptr.vmem [resolvable:$true] %s1129
      %1132 = dma.vmem_to_hbm [thread:$0]  %s1130, 16, %s6, [#allocation12]
    $region45: #{tpu_custom_call.1} parent=1 // pred_fallthru
      _
    // Predicated region
    $region46: #{tpu_custom_call.1} parent=1 // pred_check
      _
    $region47: #{tpu_custom_call.1} parent=1 // pred_check_branch
      %1134 = sbr.rel (0) target = $region49
    $region48: #{tpu_custom_call.1} parent=1 // pred_region
      %1135 = dma.done [#allocation4], 256
    $region49: #{tpu_custom_call.1} parent=1 // pred_fallthru
      _
    // Predicated region
    $region50: #{tpu_custom_call.1} parent=1 // pred_check
      _
    $region51: #{tpu_custom_call.1} parent=1 // pred_check_branch
      %1137 = sbr.rel (0) target = $region53
    $region52: #{tpu_custom_call.1} parent=1 // pred_region
      %1138 = dma.done [#allocation12], 16
    $region53: #{tpu_custom_call.1} parent=1 // pred_fallthru
      _
    %1139 = vsyncpa [#allocation3], 1
    %1140 = vsyncpa [#allocation6], 1
    %1141 = vsyncpa [#allocation9], 1
    %1142 = vsyncpa [#allocation4], 1
    %1143 = vsyncpa [#allocation12], 1

</llo_original>
